<compile_context>
chip_gen: v5e
topology: v5e:2x2
jax: 0.10.0
libtpu: 0.0.40
codegen_flags: <defaults>
</compile_context>

<pallas_src>
import functools

import jax
import jax.numpy as jnp
from jax import lax
from jax.experimental import pallas as pl
from jax.experimental.pallas import tpu as pltpu

LANE = 128
DEC_ROWS = 8                      # sublane rows per decode output block
DEC_EDGES = DEC_ROWS * LANE       # 1024 edges scored per decode grid step


def _round_up(v, m):
    return (v + m - 1) // m * m


def _pad2(a, rows, cols):
    return jnp.pad(a, ((0, rows - a.shape[0]), (0, cols - a.shape[1])))


def _pick_tile(n_pad, cap):
    # Largest power-of-two multiple of 128 that divides n_pad and is <= cap.
    for t in (1024, 512, 256, 128):
        if t <= cap and n_pad % t == 0:
            return t
    return n_pad  # unreachable: n_pad is always a multiple of 128


# ---------------------------------------------------------------------------
# Kernel 1: dense linear   support = x @ Wt + b
# ---------------------------------------------------------------------------
def _linear_kernel(x_ref, wt_ref, b_ref, out_ref):
    acc = jnp.dot(x_ref[...], wt_ref[...], preferred_element_type=jnp.float32)
    out_ref[...] = (acc + b_ref[...].astype(jnp.float32)).astype(out_ref.dtype)


def linear(x, wt, b, *, block_rows=512):
    """x: (N_pad, Fin_pad);  wt: (Fin_pad, Fout_pad) pre-transposed;  b: (1, Fout_pad)."""
    n, fin = x.shape
    fout = wt.shape[1]
    bl = _pick_tile(n, block_rows)
    return pl.pallas_call(
        _linear_kernel,
        out_shape=jax.ShapeDtypeStruct((n, fout), x.dtype),
        grid_spec=pltpu.PrefetchScalarGridSpec(
            num_scalar_prefetch=0,
            grid=(n // bl,),
            in_specs=[
                pl.BlockSpec((bl, fin), lambda i: (i, 0)),     # x row tile
                pl.BlockSpec((fin, fout), lambda i: (0, 0)),   # Wt resident
                pl.BlockSpec((1, fout), lambda i: (0, 0)),     # bias resident
            ],
            out_specs=pl.BlockSpec((bl, fout), lambda i: (i, 0)),
        ),
        compiler_params=pltpu.CompilerParams(
            dimension_semantics=("parallel",)),
    )(x, wt, b)


# ---------------------------------------------------------------------------
# Kernel 2: aggregation   out = adj @ support   [+ optional ReLU]
# Grid: (row tiles of adj, K tiles of adj) with K (reduction) last.
# ---------------------------------------------------------------------------
def _agg_kernel(adj_ref, sup_ref, out_ref, acc_ref, *, bk, apply_relu,
                sup_resident):
    k = pl.program_id(1)

    @pl.when(k == 0)
    def _():
        acc_ref[...] = jnp.zeros_like(acc_ref)

    if sup_resident:
        off = pl.multiple_of(k * bk, bk)
        sup = sup_ref[pl.ds(off, bk), :]         # slice of VMEM-resident support
    else:
        sup = sup_ref[...]                       # streamed (bk, Fout) tile

    acc_ref[...] += jnp.dot(adj_ref[...], sup,
                            preferred_element_type=jnp.float32)

    @pl.when(k == pl.num_programs(1) - 1)
    def _():
        r = acc_ref[...]
        if apply_relu:
            r = jnp.maximum(r, 0.0)
        out_ref[...] = r.astype(out_ref.dtype)


def aggregate(adj, support, *, apply_relu, tile_cap=1024):
    """adj: (N_pad, N_pad);  support: (N_pad, Fout_pad).  Returns adj @ support."""
    n = adj.shape[0]
    fout = support.shape[1]
    bm = bk = _pick_tile(n, tile_cap)
    sup_bytes = support.size * support.dtype.itemsize
    sup_resident = sup_bytes <= 4 * 1024 * 1024   # keep support in VMEM if small

    if sup_resident:
        sup_spec = pl.BlockSpec((n, fout), lambda i, k: (0, 0))
    else:
        sup_spec = pl.BlockSpec((bk, fout), lambda i, k: (k, 0))

    kernel = functools.partial(_agg_kernel, bk=bk, apply_relu=apply_relu,
                               sup_resident=sup_resident)

    flops = 2 * n * n * fout
    bytes_accessed = (adj.size * adj.dtype.itemsize
                      + (sup_bytes if sup_resident else sup_bytes * (n // bm))
                      + n * fout * support.dtype.itemsize)

    return pl.pallas_call(
        kernel,
        out_shape=jax.ShapeDtypeStruct((n, fout), support.dtype),
        grid_spec=pltpu.PrefetchScalarGridSpec(
            num_scalar_prefetch=0,
            grid=(n // bm, n // bk),
            in_specs=[
                pl.BlockSpec((bm, bk), lambda i, k: (i, k)),   # adj tile
                sup_spec,                                       # support
            ],
            out_specs=pl.BlockSpec((bm, fout), lambda i, k: (i, 0)),
            scratch_shapes=[pltpu.VMEM((bm, fout), jnp.float32)],
        ),
        compiler_params=pltpu.CompilerParams(
            dimension_semantics=("parallel", "arbitrary"),
            vmem_limit_bytes=48 * 1024 * 1024,
        ),
        cost_estimate=pl.CostEstimate(flops=flops, transcendentals=0,
                                      bytes_accessed=bytes_accessed),
    )(adj, support)


# ---------------------------------------------------------------------------
# Kernel 3: decode.  scores[e] = sum_d z[src[e], d] * z[dst[e], d]
# z is fully VMEM-resident; 1024 edges are gathered per grid step into f32
# scratch; the output is packed 128 scores per 128-lane row (lane-dense (8,128)).
# ---------------------------------------------------------------------------
def _decode_kernel(src_ref, dst_ref, z_ref, out_ref, zs_ref, zd_ref, *, d):
    base = pl.program_id(0) * DEC_EDGES

    def gather(j, carry):
        s = src_ref[base + j]
        t = dst_ref[base + j]
        zs_ref[pl.ds(j, 1), :] = z_ref[pl.ds(s, 1), :].astype(jnp.float32)
        zd_ref[pl.ds(j, 1), :] = z_ref[pl.ds(t, 1), :].astype(jnp.float32)
        return carry

    lax.fori_loop(0, DEC_EDGES, gather, 0)

    prod = zs_ref[...] * zd_ref[...]                       # (1024, d) f32
    # (1024, d) -> (8, 128, d) is a tile-aligned split of the sublane dim
    # (no relayout); reducing the lane (last) axis yields a lane-dense (8, 128)
    # block of scores: edge e = block*1024 + r*128 + c  ->  out[r, c].
    scores = jnp.sum(prod.reshape(DEC_ROWS, LANE, d), axis=-1)
    out_ref[...] = scores


def decode(z, src, dst):
    """z: (N_pad, D_pad);  src/dst: (E,) int32.  Returns (E,) f32 scores."""
    n, d = z.shape
    e = src.shape[0]
    e_pad = _round_up(e, DEC_EDGES)
    src_p = jnp.pad(src, (0, e_pad - e)).astype(jnp.int32)   # pad with node 0
    dst_p = jnp.pad(dst, (0, e_pad - e)).astype(jnp.int32)
    num_blocks = e_pad // DEC_EDGES
    # TODO(synk): if N_pad * D_pad no longer fits VMEM, switch z to
    # memory_space=pl.ANY with a manual double-buffered DMA row gather.

    out = pl.pallas_call(
        functools.partial(_decode_kernel, d=d),
        out_shape=jax.ShapeDtypeStruct((num_blocks * DEC_ROWS, LANE),
                                       jnp.float32),
        grid_spec=pltpu.PrefetchScalarGridSpec(
            num_scalar_prefetch=2,                 # src, dst -> SMEM
            grid=(num_blocks,),
            in_specs=[
                pl.BlockSpec((n, d), lambda i, src, dst: (0, 0)),   # z resident
            ],
            out_specs=pl.BlockSpec((DEC_ROWS, LANE),
                                   lambda i, src, dst: (i, 0)),
            scratch_shapes=[pltpu.VMEM((DEC_EDGES, d), jnp.float32),
                            pltpu.VMEM((DEC_EDGES, d), jnp.float32)],
        ),
        compiler_params=pltpu.CompilerParams(
            dimension_semantics=("parallel",)),    # edges independent (v7x 2-TC)
    )(src_p, dst_p, z)
    return out.reshape(-1)[:e]


# ---------------------------------------------------------------------------
# Full GCNLinkPredictor forward (inference mode)
# ---------------------------------------------------------------------------
def gcn_link_predictor_forward(params, x, adj, edge_index, *,
                               compute_dtype=jnp.bfloat16, tile_cap=1024):
    w1, b1, w2, b2 = params                     # nn.Linear layout: w (out, in)
    n, fin = x.shape
    hid = w1.shape[0]
    out_dim = w2.shape[0]

    # Lane-dense padding of feature dims; N is padded only to LANE (adj bytes
    # are quadratic in N_pad, so we never round N up to the tile size).
    fin_p = _round_up(fin, LANE)
    hid_p = _round_up(hid, LANE)
    out_p = _round_up(out_dim, LANE)
    n_p = _round_up(n, LANE)

    cd = compute_dtype
    x_p = _pad2(x, n_p, fin_p).astype(cd)
    # NOTE: adj MUST be zero-padded: the bias is added to every row of
    # `support` (padded node rows become exactly the bias), which only cancels
    # because the padded adj columns are exactly zero.
    adj_p = _pad2(adj, n_p, n_p).astype(cd)
    # Pre-transpose nn.Linear weights once on the host: (in, out) layout.
    w1t = _pad2(w1.T, fin_p, hid_p).astype(cd)
    w2t = _pad2(w2.T, hid_p, out_p).astype(cd)
    b1_p = _pad2(b1.reshape(1, -1), 1, hid_p).astype(cd)
    b2_p = _pad2(b2.reshape(1, -1), 1, out_p).astype(cd)

    # Layer 1:  h = relu(adj @ (x @ W1^T + b1))
    sup1 = linear(x_p, w1t, b1_p)
    h = aggregate(adj_p, sup1, apply_relu=True, tile_cap=tile_cap)
    # (dropout = identity in inference mode)

    # Layer 2:  z = adj @ (h @ W2^T + b2)
    sup2 = linear(h, w2t, b2_p)
    z = aggregate(adj_p, sup2, apply_relu=False, tile_cap=tile_cap)

    src = edge_index[0].astype(jnp.int32)
    dst = edge_index[1].astype(jnp.int32)
    return decode(z, src, dst)          # f32 scores regardless of compute dtype


# ---------------------------------------------------------------------------
# Pure-JAX reference (for correctness check only)
# ---------------------------------------------------------------------------
def reference_forward(params, x, adj, edge_index):
    w1, b1, w2, b2 = params
    hp = jax.lax.Precision.HIGHEST
    s1 = jnp.dot(x, w1.T, precision=hp) + b1
    h = jnp.maximum(jnp.dot(adj, s1, precision=hp), 0.0)
    s2 = jnp.dot(h, w2.T, precision=hp) + b2
    z = jnp.dot(adj, s2, precision=hp)
    src, dst = edge_index
    return jnp.sum(z[src] * z[dst], axis=1)


if __name__ == "__main__":
    # Small deterministic problem: 64 nodes, 16 in feats, 32 hidden, 16 out, 8 edges.
    N, F_IN, HID, OUT, E = 64, 16, 32, 16, 8

    key = jax.random.PRNGKey(0)
    kx, ka, kw1, kb1, kw2, kb2, ke = jax.random.split(key, 7)

    x = jax.random.normal(kx, (N, F_IN), dtype=jnp.float32)

    # Sparse-ish symmetric adjacency with self loops, row-normalized, stored dense.
    a = (jax.random.uniform(ka, (N, N)) < 0.1).astype(jnp.float32)
    a = jnp.maximum(a, a.T) + jnp.eye(N, dtype=jnp.float32)
    adj = a / jnp.sum(a, axis=1, keepdims=True)

    # nn.Linear parameters: weight (out, in), bias (out,)
    w1 = jax.random.normal(kw1, (HID, F_IN), dtype=jnp.float32) * 0.1
    b1 = jax.random.normal(kb1, (HID,), dtype=jnp.float32) * 0.1
    w2 = jax.random.normal(kw2, (OUT, HID), dtype=jnp.float32) * 0.1
    b2 = jax.random.normal(kb2, (OUT,), dtype=jnp.float32) * 0.1
    params = (w1, b1, w2, b2)

    edge_index = jax.random.randint(ke, (2, E), 0, N, dtype=jnp.int32)

    ref = reference_forward(params, x, adj, edge_index)

    # f32 path: tight tolerance.
    scores_f32 = gcn_link_predictor_forward(params, x, adj, edge_index,
                                            compute_dtype=jnp.float32)
    scores_f32 = jax.block_until_ready(scores_f32)
    assert scores_f32.shape == (E,)
    assert jnp.allclose(scores_f32, ref, rtol=1e-3, atol=1e-3), (scores_f32, ref)

    # Default bf16 path (bf16 adj / activations, f32 MXU accumulation): loose tol.
    scores_bf16 = gcn_link_predictor_forward(params, x, adj, edge_index)
    scores_bf16 = jax.block_until_ready(scores_bf16)
    assert scores_bf16.shape == (E,)
    assert jnp.allclose(scores_bf16, ref, rtol=5e-2, atol=5e-2), (scores_bf16, ref)

    print("KERNEL_OK")
</pallas_src>

<mosaic_0001>
module attributes {stable_mosaic.version = 11 : i64} {
  func.func @_linear_kernel(%arg0: i32, %arg1: memref<128x128xf32, #tpu.memory_space<vmem>>, %arg2: memref<128x128xf32, #tpu.memory_space<vmem>>, %arg3: memref<1x128xf32, #tpu.memory_space<vmem>>, %arg4: memref<128x128xf32, #tpu.memory_space<vmem>>) attributes {dimension_semantics = [#tpu.dimension_semantics<parallel>], iteration_bounds = array<i64: 1>, scalar_prefetch = 0 : i64, scratch_operands = 0 : i64, tpu.core_type = #tpu.core_type<tc>, window_params = [{transform_indices = @transform_0, window_bounds = array<i64: 128, 128>}, {pipeline_mode = #tpu.pipeline_mode<synchronous>, transform_indices = @transform_1, window_bounds = array<i64: 128, 128>}, {pipeline_mode = #tpu.pipeline_mode<synchronous>, transform_indices = @transform_2, window_bounds = array<i64: 1, 128>}, {transform_indices = @transform_3, window_bounds = array<i64: 128, 128>}]} {
    %c0 = arith.constant 0 : index
    %c0_0 = arith.constant 0 : index
    %0 = vector.load %arg1[%c0, %c0_0] : memref<128x128xf32, #tpu.memory_space<vmem>>, vector<128x128xf32>
    %c0_1 = arith.constant 0 : index
    %c0_2 = arith.constant 0 : index
    %1 = vector.load %arg2[%c0_1, %c0_2] : memref<128x128xf32, #tpu.memory_space<vmem>>, vector<128x128xf32>
    %cst = arith.constant dense<0.000000e+00> : vector<128x128xf32>
    %2 = tpu.matmul %0, %1, %cst {dimension_numbers = #tpu.dot_dimension_numbers<[1], [0], [0], [1], [0, 0, 1, 1], [], []>} : vector<128x128xf32>, vector<128x128xf32>, vector<128x128xf32> -> vector<128x128xf32>
    %c0_3 = arith.constant 0 : index
    %c0_4 = arith.constant 0 : index
    %3 = vector.load %arg3[%c0_3, %c0_4] : memref<1x128xf32, #tpu.memory_space<vmem>>, vector<1x128xf32>
    %4 = vector.broadcast %3 : vector<1x128xf32> to vector<128x128xf32>
    %5 = arith.addf %2, %4 : vector<128x128xf32>
    %c0_5 = arith.constant 0 : index
    %c0_6 = arith.constant 0 : index
    %6 = vector.load %arg4[%c0_5, %c0_6] : memref<128x128xf32, #tpu.memory_space<vmem>>, vector<128x128xf32>
    tpu.vector_store %arg4[%c0_5, %c0_6], %5 {strides = array<i32>} : memref<128x128xf32, #tpu.memory_space<vmem>>, vector<128x128xf32>,
    return
  }
  func.func @transform_0(%arg0: i32) -> (i32, i32) {
    %c0_i32 = arith.constant 0 : i32
    %c0_i32_0 = arith.constant 0 : i32
    return %arg0, %c0_i32 : i32, i32
  }
  func.func @transform_1(%arg0: i32) -> (i32, i32) {
    %c0_i32 = arith.constant 0 : i32
    %c0_i32_0 = arith.constant 0 : i32
    %c0_i32_1 = arith.constant 0 : i32
    return %c0_i32, %c0_i32_0 : i32, i32
  }
  func.func @transform_2(%arg0: i32) -> (i32, i32) {
    %c0_i32 = arith.constant 0 : i32
    %c0_i32_0 = arith.constant 0 : i32
    %c0_i32_1 = arith.constant 0 : i32
    return %c0_i32, %c0_i32_0 : i32, i32
  }
  func.func @transform_3(%arg0: i32) -> (i32, i32) {
    %c0_i32 = arith.constant 0 : i32
    %c0_i32_0 = arith.constant 0 : i32
    return %arg0, %c0_i32 : i32, i32
  }
}

</mosaic_0001>

<llo_original>
// kernel: tpu_custom_call.1
$region0: #{tpu_custom_call.1}
  #allocation0 [shape = 'u32[]', space=smem, size = 0x4, offset = 0x4, fixed_abs, tag = 'smem constant byte address 0x4 - core index']
  #allocation1 [shape = 'u32[72,128]{1,0:T(1,128)}', space=vmem, size = 0x9000, scoped, tag = 'internal scratch']
  %s0 = inlined_call_operand.hbm [shape: f32[128,128], index: 0, kind: input, shape index: {}]
  %s1 = inlined_call_operand.hbm [shape: f32[128,128], index: 1, kind: input, shape index: {}]
  %s2 = inlined_call_operand.vmem [shape: f32[1,128], index: 2, kind: input, shape index: {}]
  %s3 = inlined_call_operand.hbm [shape: f32[128,128], index: 3, kind: output, shape index: {}]
  %s4 = sld [smem:[#allocation0]]
  $region30: #{tpu_custom_call.1} parent=0
    _
  %s6 = ssub.s32 1, %s4
  %s7 = scalar_select 0, %s6, %s4
  $region1: #{tpu_custom_call.1} parent=0
    #allocation2 [shape = 'u8[65536]{0}', space=vmem, size = 0x10000, scoped, tag = 'input window, operand 0, single buffered']
    #allocation3 [shape = 's32[1]{0}', space=sflag, size = 0x4, scoped, tag = 'scoped memory for tpu_custom_call.1']
    #allocation4 [shape = 's32[1]{0}', space=sflag, size = 0x4, scoped, tag = 'scoped memory for tpu_custom_call.1']
    #allocation5 [shape = 'u8[65536]{0}', space=vmem, size = 0x10000, scoped, tag = 'input window, operand 1, single buffered']
    #allocation6 [shape = 's32[1]{0}', space=sflag, size = 0x4, scoped, tag = 'scoped memory for tpu_custom_call.1']
    #allocation7 [shape = 'u8[65536]{0}', space=vmem, size = 0x10000, scoped, tag = 'output window, operand 0, single buffered']
    %8 = vsyncpa [#allocation3], 0
    %9 = vsyncpa [#allocation6], 0
    %10 = vsyncpa [#allocation4], 0
    // Predicated region
    $region2: #{tpu_custom_call.1} parent=1 // pred_check
      _
    $region3: #{tpu_custom_call.1} parent=1 // pred_check_branch
      %12 = sbr.rel (0) target = $region5
    $region4: #{tpu_custom_call.1} parent=1 // pred_region
      %14 = vsyncadd [#allocation3], 0
      %s15 = sshll.u32 %s0, 4
      %s16 = int_to_ptr.hbm [resolvable:$true] %s15
      %s17 = sshll.u32 [#allocation2], 4
      %s18 = int_to_ptr.vmem [resolvable:$true] %s17
      %23 = dma.hbm_to_vmem [thread:$0]  %s16, 2048, %s18, [#allocation3], 128, 128, 8
    $region5: #{tpu_custom_call.1} parent=1 // pred_fallthru
      _
    // Predicated region
    $region6: #{tpu_custom_call.1} parent=1 // pred_check
      _
    $region7: #{tpu_custom_call.1} parent=1 // pred_check_branch
      %25 = sbr.rel (0) target = $region9
    $region8: #{tpu_custom_call.1} parent=1 // pred_region
      %27 = vsyncadd [#allocation6], 0
      %s28 = sshll.u32 %s1, 4
      %s29 = int_to_ptr.hbm [resolvable:$true] %s28
      %s30 = sshll.u32 [#allocation5], 4
      %s31 = int_to_ptr.vmem [resolvable:$true] %s30
      %36 = dma.hbm_to_vmem [thread:$0]  %s29, 2048, %s31, [#allocation6], 128, 128, 8
    $region9: #{tpu_custom_call.1} parent=1 // pred_fallthru
      _
    // Predicated region
    $region10: #{tpu_custom_call.1} parent=1 // pred_check
      _
    $region11: #{tpu_custom_call.1} parent=1 // pred_check_branch
      %38 = sbr.rel (0) target = $region13
    $region12: #{tpu_custom_call.1} parent=1 // pred_region
      _
    $region13: #{tpu_custom_call.1} parent=1 // pred_fallthru
      _
    // Predicated region
    $region14: #{tpu_custom_call.1} parent=1 // pred_check
      _
    $region15: #{tpu_custom_call.1} parent=1 // pred_check_branch
      %40 = sbr.rel (0) target = $region17
    $region16: #{tpu_custom_call.1} parent=1 // pred_region
      %42 = dma.done [#allocation3], 2048
    $region17: #{tpu_custom_call.1} parent=1 // pred_fallthru
      _
    // Predicated region
    $region18: #{tpu_custom_call.1} parent=1 // pred_check
      _
    $region19: #{tpu_custom_call.1} parent=1 // pred_check_branch
      %44 = sbr.rel (0) target = $region21
    $region20: #{tpu_custom_call.1} parent=1 // pred_region
      %46 = dma.done [#allocation6], 2048
    $region21: #{tpu_custom_call.1} parent=1 // pred_fallthru
      _
    %v47 = vld [vmem:[#allocation2] sm:$0xff]
    %v48 = vld [vmem:[#allocation2 + $0x8] sm:$0xff]
    %v49 = vld [vmem:[#allocation2 + $0x10] sm:$0xff]
    %v50 = vld [vmem:[#allocation2 + $0x18] sm:$0xff]
    %v51 = vld [vmem:[#allocation2 + $0x20] sm:$0xff]
    %v52 = vld [vmem:[#allocation2 + $0x28] sm:$0xff]
    %v53 = vld [vmem:[#allocation2 + $0x30] sm:$0xff]
    %v54 = vld [vmem:[#allocation2 + $0x38] sm:$0xff]
    %v55 = vld [vmem:[#allocation2 + $0x40] sm:$0xff]
    %v56 = vld [vmem:[#allocation2 + $0x48] sm:$0xff]
    %v57 = vld [vmem:[#allocation2 + $0x50] sm:$0xff]
    %v58 = vld [vmem:[#allocation2 + $0x58] sm:$0xff]
    %v59 = vld [vmem:[#allocation2 + $0x60] sm:$0xff]
    %v60 = vld [vmem:[#allocation2 + $0x68] sm:$0xff]
    %v61 = vld [vmem:[#allocation2 + $0x70] sm:$0xff]
    %v62 = vld [vmem:[#allocation2 + $0x78] sm:$0xff]
    %v63 = vld [vmem:[#allocation5] sm:$0xff]
    %v64 = vld [vmem:[#allocation5 + $0x8] sm:$0xff]
    %v65 = vld [vmem:[#allocation5 + $0x10] sm:$0xff]
    %v66 = vld [vmem:[#allocation5 + $0x18] sm:$0xff]
    %v67 = vld [vmem:[#allocation5 + $0x20] sm:$0xff]
    %v68 = vld [vmem:[#allocation5 + $0x28] sm:$0xff]
    %v69 = vld [vmem:[#allocation5 + $0x30] sm:$0xff]
    %v70 = vld [vmem:[#allocation5 + $0x38] sm:$0xff]
    %v71 = vld [vmem:[#allocation5 + $0x40] sm:$0xff]
    %v72 = vld [vmem:[#allocation5 + $0x48] sm:$0xff]
    %v73 = vld [vmem:[#allocation5 + $0x50] sm:$0xff]
    %v74 = vld [vmem:[#allocation5 + $0x58] sm:$0xff]
    %v75 = vld [vmem:[#allocation5 + $0x60] sm:$0xff]
    %v76 = vld [vmem:[#allocation5 + $0x68] sm:$0xff]
    %v77 = vld [vmem:[#allocation5 + $0x70] sm:$0xff]
    %v78 = vld [vmem:[#allocation5 + $0x78] sm:$0xff]
    %v79 = vld [vmem:[%s2] sm:$0x1]
    %v81 = vperm.slane %v79, 0
    %83 = vmatpush.msra.mxu0 %v78
    %84 = vmatpush.msra.mxu0 %v77
    %85 = vmatpush.msra.mxu0 %v76
    %86 = vmatpush.msra.mxu0 %v75
    %87 = vmatpush.msra.mxu0 %v74
    %88 = vmatpush.msra.mxu0 %v73
    %89 = vmatpush.msra.mxu0 %v72
    %90 = vmatpush.msra.mxu0 %v71
    %91 = vmatpush.msra.mxu0 %v70
    %92 = vmatpush.msra.mxu0 %v69
    %93 = vmatpush.msra.mxu0 %v68
    %94 = vmatpush.msra.mxu0 %v67
    %95 = vmatpush.msra.mxu0 %v66
    %96 = vmatpush.msra.mxu0 %v65
    %97 = vmatpush.msra.mxu0 %v64
    %98 = vmatpush.msra.mxu0 %v63
    %99 = vmatmul.f32.gmra.mxu0 %v47
    %v100 = vpop.f32.mrf.mxu0
    %v101 = vadd.f32 %v81, %v100
    %102 = vmatmul.f32.gmra.mxu0 %v48
    %v103 = vpop.f32.mrf.mxu0
    %v104 = vadd.f32 %v81, %v103
    %105 = vmatmul.f32.gmra.mxu0 %v49
    %v106 = vpop.f32.mrf.mxu0
    %v107 = vadd.f32 %v81, %v106
    %108 = vmatmul.f32.gmra.mxu0 %v50
    %v109 = vpop.f32.mrf.mxu0
    %v110 = vadd.f32 %v81, %v109
    %111 = vmatmul.f32.gmra.mxu0 %v51
    %v112 = vpop.f32.mrf.mxu0
    %v113 = vadd.f32 %v81, %v112
    %114 = vmatmul.f32.gmra.mxu0 %v52
    %v115 = vpop.f32.mrf.mxu0
    %v116 = vadd.f32 %v81, %v115
    %117 = vmatmul.f32.gmra.mxu0 %v53
    %v118 = vpop.f32.mrf.mxu0
    %v119 = vadd.f32 %v81, %v118
    %120 = vmatmul.f32.gmra.mxu0 %v54
    %v121 = vpop.f32.mrf.mxu0
    %v122 = vadd.f32 %v81, %v121
    %123 = vmatmul.f32.gmra.mxu0 %v55
    %v124 = vpop.f32.mrf.mxu0
    %v125 = vadd.f32 %v81, %v124
    %126 = vmatmul.f32.gmra.mxu0 %v56
    %v127 = vpop.f32.mrf.mxu0
    %v128 = vadd.f32 %v81, %v127
    %129 = vmatmul.f32.gmra.mxu0 %v57
    %v130 = vpop.f32.mrf.mxu0
    %v131 = vadd.f32 %v81, %v130
    %132 = vmatmul.f32.gmra.mxu0 %v58
    %v133 = vpop.f32.mrf.mxu0
    %v134 = vadd.f32 %v81, %v133
    %135 = vmatmul.f32.gmra.mxu0 %v59
    %v136 = vpop.f32.mrf.mxu0
    %v137 = vadd.f32 %v81, %v136
    %138 = vmatmul.f32.gmra.mxu0 %v60
    %v139 = vpop.f32.mrf.mxu0
    %v140 = vadd.f32 %v81, %v139
    %141 = vmatmul.f32.gmra.mxu0 %v61
    %v142 = vpop.f32.mrf.mxu0
    %v143 = vadd.f32 %v81, %v142
    %144 = vmatmul.f32.gmra.mxu0 %v62
    %v145 = vpop.f32.mrf.mxu0
    %v146 = vadd.f32 %v81, %v145
    %147 = vdwg.mxu0
    %148 = vst [vmem:[#allocation7] sm:$0xff] %v101
    %149 = vst [vmem:[#allocation7 + $0x8] sm:$0xff] %v104
    %150 = vst [vmem:[#allocation7 + $0x10] sm:$0xff] %v107
    %151 = vst [vmem:[#allocation7 + $0x18] sm:$0xff] %v110
    %152 = vst [vmem:[#allocation7 + $0x20] sm:$0xff] %v113
    %153 = vst [vmem:[#allocation7 + $0x28] sm:$0xff] %v116
    %154 = vst [vmem:[#allocation7 + $0x30] sm:$0xff] %v119
    %155 = vst [vmem:[#allocation7 + $0x38] sm:$0xff] %v122
    %156 = vst [vmem:[#allocation7 + $0x40] sm:$0xff] %v125
    %157 = vst [vmem:[#allocation7 + $0x48] sm:$0xff] %v128
    %158 = vst [vmem:[#allocation7 + $0x50] sm:$0xff] %v131
    %159 = vst [vmem:[#allocation7 + $0x58] sm:$0xff] %v134
    %160 = vst [vmem:[#allocation7 + $0x60] sm:$0xff] %v137
    %161 = vst [vmem:[#allocation7 + $0x68] sm:$0xff] %v140
    %162 = vst [vmem:[#allocation7 + $0x70] sm:$0xff] %v143
    %163 = vst [vmem:[#allocation7 + $0x78] sm:$0xff] %v146
    // Predicated region
    $region22: #{tpu_custom_call.1} parent=1 // pred_check
      _
    $region23: #{tpu_custom_call.1} parent=1 // pred_check_branch
      %165 = sbr.rel (0) target = $region25
    $region24: #{tpu_custom_call.1} parent=1 // pred_region
      %167 = vsyncadd [#allocation4], 0
      %s168 = sshll.u32 [#allocation7], 4
      %s169 = int_to_ptr.vmem [resolvable:$true] %s168
      %s170 = sshll.u32 %s3, 4
      %s171 = int_to_ptr.hbm [resolvable:$true] %s170
      %176 = dma.vmem_to_hbm [thread:$0]  %s169, 2048, %s171, [#allocation4], 128, 128, 8
    $region25: #{tpu_custom_call.1} parent=1 // pred_fallthru
      _
    // Predicated region
    $region26: #{tpu_custom_call.1} parent=1 // pred_check
      _
    $region27: #{tpu_custom_call.1} parent=1 // pred_check_branch
      %178 = sbr.rel (0) target = $region29
    $region28: #{tpu_custom_call.1} parent=1 // pred_region
      %180 = dma.done [#allocation4], 2048
    $region29: #{tpu_custom_call.1} parent=1 // pred_fallthru
      _
    %181 = vsyncpa [#allocation3], 1
    %182 = vsyncpa [#allocation6], 1
    %183 = vsyncpa [#allocation4], 1

</llo_original>
